<compile_context>
chip_gen: v7x
topology: tpu7x:2x2x1
jax: 0.10.0
libtpu: 0.0.40
codegen_flags: <defaults>
</compile_context>

<pallas_src>
import functools

import jax
import jax.numpy as jnp
from jax.experimental import pallas as pl
from jax.experimental.pallas import tpu as pltpu


# --------------------------------------------------------------------------- #
# Kernel
# --------------------------------------------------------------------------- #
def _gru_cell_kernel(x_ref, h_ref, wxt_ref, bx_ref, wht_ref, bh_ref, o_ref,
                     *, sequential):
    """One row-tile of the GRUCell forward.

    x_ref   : (tile_rows, in_dim)   native dtype
    h_ref   : (tile_rows, hid)      native dtype
    wxt_ref : (in_dim, 3*hid)       x2h.weight.T  (resident, single-buffered)
    bx_ref  : (1, 3*hid)            x2h.bias, f32
    wht_ref : (hid, 3*hid)          h2h.weight.T  (resident, single-buffered)
    bh_ref  : (1, 3*hid)            h2h.bias, f32
    o_ref   : (tile_rows, hid)      new hidden state hy
    """
    hid = o_ref.shape[-1]

    x = x_ref[...]                       # native dtype straight into the MXU
    h = h_ref[...]
    h32 = h.astype(jnp.float32)          # f32 gate math (cheap per-tile cast)

    if sequential:
        # Per-gate matmuls: peak live f32 temporaries ~3-4*hid per row instead
        # of ~10*hid.  Only used when hid >= 256 (slices stay lane-aligned).
        def gate(g):
            lo = g * hid
            gx = jnp.dot(x, wxt_ref[:, lo:lo + hid],
                         preferred_element_type=jnp.float32) + bx_ref[:, lo:lo + hid]
            gh = jnp.dot(h, wht_ref[:, lo:lo + hid],
                         preferred_element_type=jnp.float32) + bh_ref[:, lo:lo + hid]
            return gx, gh

        i_r, h_r = gate(0)
        resetgate = jax.nn.sigmoid(i_r + h_r)          # EUP
        i_i, h_i = gate(1)
        inputgate = jax.nn.sigmoid(i_i + h_i)          # EUP
        i_n, h_n = gate(2)
        newgate = jnp.tanh(i_n + resetgate * h_n)      # EUP + VPU
    else:
        # Full (tile_rows, 3*hid) gate tensors, single matmul each.
        gate_x = jnp.dot(x, wxt_ref[...],
                         preferred_element_type=jnp.float32) + bx_ref[...]
        gate_h = jnp.dot(h, wht_ref[...],
                         preferred_element_type=jnp.float32) + bh_ref[...]

        # torch.chunk(3, dim=1): [r | z | n].  Static slices.
        i_r = gate_x[:, 0 * hid:1 * hid]
        i_i = gate_x[:, 1 * hid:2 * hid]
        i_n = gate_x[:, 2 * hid:3 * hid]
        h_r = gate_h[:, 0 * hid:1 * hid]
        h_i = gate_h[:, 1 * hid:2 * hid]
        h_n = gate_h[:, 2 * hid:3 * hid]

        resetgate = jax.nn.sigmoid(i_r + h_r)
        inputgate = jax.nn.sigmoid(i_i + h_i)
        newgate = jnp.tanh(i_n + resetgate * h_n)

    hy = newgate + inputgate * (h32 - newgate)          # VPU
    o_ref[...] = hy.astype(o_ref.dtype)


# --------------------------------------------------------------------------- #
# Sizing helpers
# --------------------------------------------------------------------------- #
def _default_vmem_limit():
    """Generation-aware scoped-VMEM limit (~7/8 of physical per-TC capacity)."""
    try:
        cap = int(pltpu.get_tpu_info().vmem_capacity_bytes)
    except Exception:
        cap = 64 << 20                    # conservative (v7x-sized) fallback
    return cap - cap // 8                 # v5e/v6e: ~112 MiB, v7x: ~56 MiB


def _choose_tile_rows(rows, in_dim, hid, act_itemsize, weight_itemsize,
                      vmem_limit, weight_buffers=1):
    """Largest MXU-friendly row tile whose row-proportional VMEM fits the
    budget left after the resident (single-buffered) weights/biases."""
    resident = weight_buffers * (
        (in_dim + hid) * 3 * hid * weight_itemsize   # wxt + wht
        + 2 * 3 * hid * 4                            # f32 biases
    )
    budget = int(vmem_limit * 0.75) - resident        # headroom for compiler scratch
    # Double-buffered x / h / out blocks + f32 temporaries
    # (gate_x + gate_h = 6*hid, plus ~4 hid-wide gate intermediates).
    per_row = 2 * (in_dim + 2 * hid) * act_itemsize + (6 * hid + 4 * hid) * 4

    min_rows = 16 if act_itemsize < 4 else 8          # bf16 sublane packing
    if budget <= per_row * min_rows:
        # TODO(synk): switch to a K-tiled reduction-grid path here instead of
        # relying on compiler spilling when weights barely fit.
        return min(rows, min_rows)

    tile = budget // max(per_row, 1)
    tile = int(min(tile, 1024, rows))                  # >=85% roofline by ~512-1024
    if tile >= rows:
        return rows                                    # full-extent block, always legal
    for m in (256, 128, 32, 16, 8):                    # MXU-edge-friendly rounding
        if tile >= m and m >= min_rows:
            return (tile // m) * m
    return min_rows


# --------------------------------------------------------------------------- #
# Wrapper
# --------------------------------------------------------------------------- #
def prepare_gru_params(x2h_weight, x2h_bias, h2h_weight, h2h_bias,
                       *, compute_dtype=None):
    """Hoist transposes / reshapes / casts so an RNN time loop pays them once."""
    hid3 = x2h_weight.shape[0]
    wxt = x2h_weight.T                                  # (in_dim, 3*hid)
    wht = h2h_weight.T                                  # (hid,   3*hid)
    if compute_dtype is not None:                       # e.g. bf16 MXU path
        wxt = wxt.astype(compute_dtype)
        wht = wht.astype(compute_dtype)
    bx2 = x2h_bias.reshape(1, hid3).astype(jnp.float32)
    bh2 = h2h_bias.reshape(1, hid3).astype(jnp.float32)
    return wxt, bx2, wht, bh2


def _build_and_run(x2, hidden, wxt, bx2, wht, bh2, *, tile_rows, vmem_limit,
                   sequential, single_buffer_weights):
    rows, in_dim = x2.shape
    hid = hidden.shape[-1]
    grid = (pl.cdiv(rows, tile_rows),)

    if single_buffer_weights:
        mode = pl.Buffered(buffer_count=1)
        def const_spec(shape):
            return pl.BlockSpec(shape, lambda i: (0, 0), pipeline_mode=mode)
    else:
        def const_spec(shape):
            return pl.BlockSpec(shape, lambda i: (0, 0))

    kernel = functools.partial(_gru_cell_kernel, sequential=sequential)

    return pl.pallas_call(
        kernel,
        out_shape=jax.ShapeDtypeStruct((rows, hid), hidden.dtype),
        grid_spec=pltpu.PrefetchScalarGridSpec(
            num_scalar_prefetch=0,
            grid=grid,
            in_specs=[
                pl.BlockSpec((tile_rows, in_dim), lambda i: (i, 0)),
                pl.BlockSpec((tile_rows, hid), lambda i: (i, 0)),
                # Weights / biases: full-array blocks, constant index_map,
                # single-buffered -> fetched once, resident for every row tile.
                const_spec((in_dim, 3 * hid)),
                const_spec((1, 3 * hid)),
                const_spec((hid, 3 * hid)),
                const_spec((1, 3 * hid)),
            ],
            out_specs=pl.BlockSpec((tile_rows, hid), lambda i: (i, 0)),
        ),
        compiler_params=pltpu.CompilerParams(
            dimension_semantics=("parallel",),     # shard row tiles across TCs (v7x)
            vmem_limit_bytes=vmem_limit,           # generation-aware ceiling
        ),
    )(x2, hidden, wxt, bx2, wht, bh2)


def gru_cell(x, hidden, x2h_weight, x2h_bias, h2h_weight, h2h_bias,
             *, tile_rows=None, vmem_limit_bytes=None, compute_dtype=None):
    """GRUCell forward.  x: (..., in_dim), hidden: (rows, hid). Returns (rows, hid)."""
    in_dim = x.shape[-1]
    hid = hidden.shape[-1]

    x2 = x.reshape(-1, in_dim)                # matches torch x.view(-1, x.size(-1))
    rows = x2.shape[0]
    assert hidden.shape == (rows, hid)
    assert x2h_weight.shape == (3 * hid, in_dim)
    assert h2h_weight.shape == (3 * hid, hid)

    wxt, bx2, wht, bh2 = prepare_gru_params(
        x2h_weight, x2h_bias, h2h_weight, h2h_bias, compute_dtype=compute_dtype)
    # Matmul operands must share a dtype; cast weights once (outside the kernel).
    if wxt.dtype != x2.dtype:
        wxt = wxt.astype(x2.dtype)
    if wht.dtype != hidden.dtype:
        wht = wht.astype(hidden.dtype)

    if vmem_limit_bytes is None:
        vmem_limit_bytes = _default_vmem_limit()
    if tile_rows is None:
        tile_rows = _choose_tile_rows(rows, in_dim, hid,
                                      act_itemsize=x2.dtype.itemsize,
                                      weight_itemsize=wxt.dtype.itemsize,
                                      vmem_limit=vmem_limit_bytes,
                                      weight_buffers=1)

    # Sequential per-gate matmuls only when slices stay lane-aligned (hid%128==0)
    # and hid is big enough for the temp-footprint saving to matter.
    sequential = (hid >= 256) and (hid % 128 == 0)

    single_buffer = hasattr(pl, "Buffered")
    try:
        return _build_and_run(x2, hidden, wxt, bx2, wht, bh2,
                              tile_rows=tile_rows, vmem_limit=vmem_limit_bytes,
                              sequential=sequential,
                              single_buffer_weights=single_buffer)
    except Exception:
        if not single_buffer:
            raise
        # Fallback: some runtimes reject Buffered(1); default double-buffering
        # is functionally identical (just uses more VMEM).
        return _build_and_run(x2, hidden, wxt, bx2, wht, bh2,
                              tile_rows=tile_rows, vmem_limit=vmem_limit_bytes,
                              sequential=sequential,
                              single_buffer_weights=False)


# --------------------------------------------------------------------------- #
# Pure-JAX reference (matches the PyTorch forward exactly)
# --------------------------------------------------------------------------- #
def gru_cell_ref(x, hidden, x2h_weight, x2h_bias, h2h_weight, h2h_bias):
    x2 = x.reshape(-1, x.shape[-1])
    gate_x = x2 @ x2h_weight.T + x2h_bias
    gate_h = hidden @ h2h_weight.T + h2h_bias
    i_r, i_i, i_n = jnp.split(gate_x, 3, axis=1)
    h_r, h_i, h_n = jnp.split(gate_h, 3, axis=1)
    resetgate = jax.nn.sigmoid(i_r + h_r)
    inputgate = jax.nn.sigmoid(i_i + h_i)
    newgate = jnp.tanh(i_n + resetgate * h_n)
    return newgate + inputgate * (hidden - newgate)


if __name__ == "__main__":
    key = jax.random.PRNGKey(0)
    in_dim, hid = 16, 32
    batch, seq = 2, 8                     # x is flattened to (batch*seq, in_dim)
    rows = batch * seq

    k_x, k_h, k_wx, k_bx, k_wh, k_bh = jax.random.split(key, 6)
    std = 1.0 / (hid ** 0.5)              # matches reset_parameters()

    x = jax.random.normal(k_x, (batch, seq, in_dim), dtype=jnp.float32)
    hidden = jax.random.normal(k_h, (rows, hid), dtype=jnp.float32)
    x2h_w = jax.random.uniform(k_wx, (3 * hid, in_dim), jnp.float32, -std, std)
    x2h_b = jax.random.uniform(k_bx, (3 * hid,), jnp.float32, -std, std)
    h2h_w = jax.random.uniform(k_wh, (3 * hid, hid), jnp.float32, -std, std)
    h2h_b = jax.random.uniform(k_bh, (3 * hid,), jnp.float32, -std, std)

    hy = gru_cell(x, hidden, x2h_w, x2h_b, h2h_w, h2h_b)
    hy = jax.block_until_ready(hy)

    ref = gru_cell_ref(x, hidden, x2h_w, x2h_b, h2h_w, h2h_b)
    assert hy.shape == (rows, hid)
    assert jnp.allclose(hy, ref, atol=1e-5, rtol=1e-5), "mismatch vs reference"

    print("KERNEL_OK")
</pallas_src>

<mosaic_0001>
module attributes {stable_mosaic.version = 11 : i64} {
  func.func @_gru_cell_kernel(%arg0: i32, %arg1: memref<16x16xf32, #tpu.memory_space<vmem>>, %arg2: memref<16x32xf32, #tpu.memory_space<vmem>>, %arg3: memref<16x96xf32, #tpu.memory_space<vmem>>, %arg4: memref<1x96xf32, #tpu.memory_space<vmem>>, %arg5: memref<32x96xf32, #tpu.memory_space<vmem>>, %arg6: memref<1x96xf32, #tpu.memory_space<vmem>>, %arg7: memref<16x32xf32, #tpu.memory_space<vmem>>) attributes {dimension_semantics = [#tpu.dimension_semantics<parallel>], iteration_bounds = array<i64: 1>, scalar_prefetch = 0 : i64, scratch_operands = 0 : i64, tpu.core_type = #tpu.core_type<tc>, window_params = [{transform_indices = @transform_0, window_bounds = array<i64: 16, 16>}, {transform_indices = @transform_1, window_bounds = array<i64: 16, 32>}, {pipeline_mode = #tpu.pipeline_mode<synchronous>, transform_indices = @transform_2, window_bounds = array<i64: 16, 96>}, {pipeline_mode = #tpu.pipeline_mode<synchronous>, transform_indices = @transform_3, window_bounds = array<i64: 1, 96>}, {pipeline_mode = #tpu.pipeline_mode<synchronous>, transform_indices = @transform_4, window_bounds = array<i64: 32, 96>}, {pipeline_mode = #tpu.pipeline_mode<synchronous>, transform_indices = @transform_5, window_bounds = array<i64: 1, 96>}, {transform_indices = @transform_6, window_bounds = array<i64: 16, 32>}]} {
    %c0 = arith.constant 0 : index
    %c0_0 = arith.constant 0 : index
    %0 = vector.load %arg1[%c0, %c0_0] : memref<16x16xf32, #tpu.memory_space<vmem>>, vector<16x16xf32>
    %c0_1 = arith.constant 0 : index
    %c0_2 = arith.constant 0 : index
    %1 = vector.load %arg2[%c0_1, %c0_2] : memref<16x32xf32, #tpu.memory_space<vmem>>, vector<16x32xf32>
    %c0_3 = arith.constant 0 : index
    %c0_4 = arith.constant 0 : index
    %2 = vector.load %arg3[%c0_3, %c0_4] : memref<16x96xf32, #tpu.memory_space<vmem>>, vector<16x96xf32>
    %cst = arith.constant dense<0.000000e+00> : vector<16x96xf32>
    %3 = tpu.matmul %0, %2, %cst {dimension_numbers = #tpu.dot_dimension_numbers<[1], [0], [0], [1], [0, 0, 1, 1], [], []>} : vector<16x16xf32>, vector<16x96xf32>, vector<16x96xf32> -> vector<16x96xf32>
    %c0_5 = arith.constant 0 : index
    %c0_6 = arith.constant 0 : index
    %4 = vector.load %arg4[%c0_5, %c0_6] : memref<1x96xf32, #tpu.memory_space<vmem>>, vector<1x96xf32>
    %5 = vector.broadcast %4 : vector<1x96xf32> to vector<16x96xf32>
    %6 = arith.addf %3, %5 : vector<16x96xf32>
    %c0_7 = arith.constant 0 : index
    %c0_8 = arith.constant 0 : index
    %7 = vector.load %arg5[%c0_7, %c0_8] : memref<32x96xf32, #tpu.memory_space<vmem>>, vector<32x96xf32>
    %cst_9 = arith.constant dense<0.000000e+00> : vector<16x96xf32>
    %8 = tpu.matmul %1, %7, %cst_9 {dimension_numbers = #tpu.dot_dimension_numbers<[1], [0], [0], [1], [0, 0, 1, 1], [], []>} : vector<16x32xf32>, vector<32x96xf32>, vector<16x96xf32> -> vector<16x96xf32>
    %c0_10 = arith.constant 0 : index
    %c0_11 = arith.constant 0 : index
    %9 = vector.load %arg6[%c0_10, %c0_11] : memref<1x96xf32, #tpu.memory_space<vmem>>, vector<1x96xf32>
    %10 = vector.broadcast %9 : vector<1x96xf32> to vector<16x96xf32>
    %11 = arith.addf %8, %10 : vector<16x96xf32>
    %12 = vector.extract_strided_slice %6 {offsets = [0, 0], sizes = [16, 32], strides = [1, 1]} : vector<16x96xf32> to vector<16x32xf32>
    %13 = vector.extract_strided_slice %6 {offsets = [0, 32], sizes = [16, 32], strides = [1, 1]} : vector<16x96xf32> to vector<16x32xf32>
    %14 = vector.extract_strided_slice %6 {offsets = [0, 64], sizes = [16, 32], strides = [1, 1]} : vector<16x96xf32> to vector<16x32xf32>
    %15 = vector.extract_strided_slice %11 {offsets = [0, 0], sizes = [16, 32], strides = [1, 1]} : vector<16x96xf32> to vector<16x32xf32>
    %16 = vector.extract_strided_slice %11 {offsets = [0, 32], sizes = [16, 32], strides = [1, 1]} : vector<16x96xf32> to vector<16x32xf32>
    %17 = vector.extract_strided_slice %11 {offsets = [0, 64], sizes = [16, 32], strides = [1, 1]} : vector<16x96xf32> to vector<16x32xf32>
    %18 = arith.addf %12, %15 : vector<16x32xf32>
    %19 = arith.negf %18 : vector<16x32xf32>
    %20 = math.exp %19 : vector<16x32xf32>
    %cst_12 = arith.constant 1.000000e+00 : f32
    %21 = vector.broadcast %cst_12 : f32 to vector<16x32xf32>
    %22 = arith.addf %21, %20 : vector<16x32xf32>
    %23 = arith.divf %21, %22 : vector<16x32xf32>
    %24 = arith.addf %13, %16 : vector<16x32xf32>
    %25 = arith.negf %24 : vector<16x32xf32>
    %26 = math.exp %25 : vector<16x32xf32>
    %cst_13 = arith.constant 1.000000e+00 : f32
    %27 = vector.broadcast %cst_13 : f32 to vector<16x32xf32>
    %28 = arith.addf %27, %26 : vector<16x32xf32>
    %29 = arith.divf %27, %28 : vector<16x32xf32>
    %30 = arith.mulf %23, %17 : vector<16x32xf32>
    %31 = arith.addf %14, %30 : vector<16x32xf32>
    %32 = math.tanh %31 : vector<16x32xf32>
    %33 = arith.subf %1, %32 : vector<16x32xf32>
    %34 = arith.mulf %29, %33 : vector<16x32xf32>
    %35 = arith.addf %32, %34 : vector<16x32xf32>
    %c0_14 = arith.constant 0 : index
    %c0_15 = arith.constant 0 : index
    %36 = vector.load %arg7[%c0_14, %c0_15] : memref<16x32xf32, #tpu.memory_space<vmem>>, vector<16x32xf32>
    tpu.vector_store %arg7[%c0_14, %c0_15], %35 {strides = array<i32>} : memref<16x32xf32, #tpu.memory_space<vmem>>, vector<16x32xf32>,
    return
  }
  func.func @transform_0(%arg0: i32) -> (i32, i32) {
    %c0_i32 = arith.constant 0 : i32
    %c0_i32_0 = arith.constant 0 : i32
    return %arg0, %c0_i32 : i32, i32
  }
  func.func @transform_1(%arg0: i32) -> (i32, i32) {
    %c0_i32 = arith.constant 0 : i32
    %c0_i32_0 = arith.constant 0 : i32
    return %arg0, %c0_i32 : i32, i32
  }
  func.func @transform_2(%arg0: i32) -> (i32, i32) {
    %c0_i32 = arith.constant 0 : i32
    %c0_i32_0 = arith.constant 0 : i32
    %c0_i32_1 = arith.constant 0 : i32
    return %c0_i32, %c0_i32_0 : i32, i32
  }
  func.func @transform_3(%arg0: i32) -> (i32, i32) {
    %c0_i32 = arith.constant 0 : i32
    %c0_i32_0 = arith.constant 0 : i32
    %c0_i32_1 = arith.constant 0 : i32
    return %c0_i32, %c0_i32_0 : i32, i32
  }
  func.func @transform_4(%arg0: i32) -> (i32, i32) {
    %c0_i32 = arith.constant 0 : i32
    %c0_i32_0 = arith.constant 0 : i32
    %c0_i32_1 = arith.constant 0 : i32
    return %c0_i32, %c0_i32_0 : i32, i32
  }
  func.func @transform_5(%arg0: i32) -> (i32, i32) {
    %c0_i32 = arith.constant 0 : i32
    %c0_i32_0 = arith.constant 0 : i32
    %c0_i32_1 = arith.constant 0 : i32
    return %c0_i32, %c0_i32_0 : i32, i32
  }
  func.func @transform_6(%arg0: i32) -> (i32, i32) {
    %c0_i32 = arith.constant 0 : i32
    %c0_i32_0 = arith.constant 0 : i32
    return %arg0, %c0_i32 : i32, i32
  }
}

module attributes {stable_mosaic.version = 11 : i64} {
  func.func @_gru_cell_kernel(%arg0: i32, %arg1: memref<16x16xf32, #tpu.memory_space<vmem>>, %arg2: memref<16x32xf32, #tpu.memory_space<vmem>>, %arg3: memref<16x96xf32, #tpu.memory_space<vmem>>, %arg4: memref<1x96xf32, #tpu.memory_space<vmem>>, %arg5: memref<32x96xf32, #tpu.memory_space<vmem>>, %arg6: memref<1x96xf32, #tpu.memory_space<vmem>>, %arg7: memref<16x32xf32, #tpu.memory_space<vmem>>) attributes {dimension_semantics = [#tpu.dimension_semantics<parallel>], iteration_bounds = array<i64: 1>, scalar_prefetch = 0 : i64, scratch_operands = 0 : i64, tpu.core_type = #tpu.core_type<tc>, window_params = [{transform_indices = @transform_0, window_bounds = array<i64: 16, 16>}, {transform_indices = @transform_1, window_bounds = array<i64: 16, 32>}, {pipeline_mode = #tpu.pipeline_mode<synchronous>, transform_indices = @transform_2, window_bounds = array<i64: 16, 96>}, {pipeline_mode = #tpu.pipeline_mode<synchronous>, transform_indices = @transform_3, window_bounds = array<i64: 1, 96>}, {pipeline_mode = #tpu.pipeline_mode<synchronous>, transform_indices = @transform_4, window_bounds = array<i64: 32, 96>}, {pipeline_mode = #tpu.pipeline_mode<synchronous>, transform_indices = @transform_5, window_bounds = array<i64: 1, 96>}, {transform_indices = @transform_6, window_bounds = array<i64: 16, 32>}]} {
    %c0 = arith.constant 0 : index
    %c0_0 = arith.constant 0 : index
    %0 = vector.load %arg1[%c0, %c0_0] : memref<16x16xf32, #tpu.memory_space<vmem>>, vector<16x16xf32>
    %c0_1 = arith.constant 0 : index
    %c0_2 = arith.constant 0 : index
    %1 = vector.load %arg2[%c0_1, %c0_2] : memref<16x32xf32, #tpu.memory_space<vmem>>, vector<16x32xf32>
    %c0_3 = arith.constant 0 : index
    %c0_4 = arith.constant 0 : index
    %2 = vector.load %arg3[%c0_3, %c0_4] : memref<16x96xf32, #tpu.memory_space<vmem>>, vector<16x96xf32>
    %cst = arith.constant dense<0.000000e+00> : vector<16x96xf32>
    %3 = tpu.matmul %0, %2, %cst {dimension_numbers = #tpu.dot_dimension_numbers<[1], [0], [0], [1], [0, 0, 1, 1], [], []>} : vector<16x16xf32>, vector<16x96xf32>, vector<16x96xf32> -> vector<16x96xf32>
    %c0_5 = arith.constant 0 : index
    %c0_6 = arith.constant 0 : index
    %4 = vector.load %arg4[%c0_5, %c0_6] : memref<1x96xf32, #tpu.memory_space<vmem>>, vector<1x96xf32>
    %5 = vector.broadcast %4 : vector<1x96xf32> to vector<16x96xf32>
    %6 = arith.addf %3, %5 : vector<16x96xf32>
    %c0_7 = arith.constant 0 : index
    %c0_8 = arith.constant 0 : index
    %7 = vector.load %arg5[%c0_7, %c0_8] : memref<32x96xf32, #tpu.memory_space<vmem>>, vector<32x96xf32>
    %cst_9 = arith.constant dense<0.000000e+00> : vector<16x96xf32>
    %8 = tpu.matmul %1, %7, %cst_9 {dimension_numbers = #tpu.dot_dimension_numbers<[1], [0], [0], [1], [0, 0, 1, 1], [], []>} : vector<16x32xf32>, vector<32x96xf32>, vector<16x96xf32> -> vector<16x96xf32>
    %c0_10 = arith.constant 0 : index
    %c0_11 = arith.constant 0 : index
    %9 = vector.load %arg6[%c0_10, %c0_11] : memref<1x96xf32, #tpu.memory_space<vmem>>, vector<1x96xf32>
    %10 = vector.broadcast %9 : vector<1x96xf32> to vector<16x96xf32>
    %11 = arith.addf %8, %10 : vector<16x96xf32>
    %12 = vector.extract_strided_slice %6 {offsets = [0, 0], sizes = [16, 32], strides = [1, 1]} : vector<16x96xf32> to vector<16x32xf32>
    %13 = vector.extract_strided_slice %6 {offsets = [0, 32], sizes = [16, 32], strides = [1, 1]} : vector<16x96xf32> to vector<16x32xf32>
    %14 = vector.extract_strided_slice %6 {offsets = [0, 64], sizes = [16, 32], strides = [1, 1]} : vector<16x96xf32> to vector<16x32xf32>
    %15 = vector.extract_strided_slice %11 {offsets = [0, 0], sizes = [16, 32], strides = [1, 1]} : vector<16x96xf32> to vector<16x32xf32>
    %16 = vector.extract_strided_slice %11 {offsets = [0, 32], sizes = [16, 32], strides = [1, 1]} : vector<16x96xf32> to vector<16x32xf32>
    %17 = vector.extract_strided_slice %11 {offsets = [0, 64], sizes = [16, 32], strides = [1, 1]} : vector<16x96xf32> to vector<16x32xf32>
    %18 = arith.addf %12, %15 : vector<16x32xf32>
    %19 = arith.negf %18 : vector<16x32xf32>
    %20 = math.exp %19 : vector<16x32xf32>
    %cst_12 = arith.constant 1.000000e+00 : f32
    %21 = vector.broadcast %cst_12 : f32 to vector<16x32xf32>
    %22 = arith.addf %21, %20 : vector<16x32xf32>
    %23 = arith.divf %21, %22 : vector<16x32xf32>
    %24 = arith.addf %13, %16 : vector<16x32xf32>
    %25 = arith.negf %24 : vector<16x32xf32>
    %26 = math.exp %25 : vector<16x32xf32>
    %cst_13 = arith.constant 1.000000e+00 : f32
    %27 = vector.broadcast %cst_13 : f32 to vector<16x32xf32>
    %28 = arith.addf %27, %26 : vector<16x32xf32>
    %29 = arith.divf %27, %28 : vector<16x32xf32>
    %30 = arith.mulf %23, %17 : vector<16x32xf32>
    %31 = arith.addf %14, %30 : vector<16x32xf32>
    %32 = math.tanh %31 : vector<16x32xf32>
    %33 = arith.subf %1, %32 : vector<16x32xf32>
    %34 = arith.mulf %29, %33 : vector<16x32xf32>
    %35 = arith.addf %32, %34 : vector<16x32xf32>
    %c0_14 = arith.constant 0 : index
    %c0_15 = arith.constant 0 : index
    %36 = vector.load %arg7[%c0_14, %c0_15] : memref<16x32xf32, #tpu.memory_space<vmem>>, vector<16x32xf32>
    tpu.vector_store %arg7[%c0_14, %c0_15], %35 {strides = array<i32>} : memref<16x32xf32, #tpu.memory_space<vmem>>, vector<16x32xf32>,
    return
  }
  func.func @transform_0(%arg0: i32) -> (i32, i32) {
    %c0_i32 = arith.constant 0 : i32
    %c0_i32_0 = arith.constant 0 : i32
    return %arg0, %c0_i32 : i32, i32
  }
  func.func @transform_1(%arg0: i32) -> (i32, i32) {
    %c0_i32 = arith.constant 0 : i32
    %c0_i32_0 = arith.constant 0 : i32
    return %arg0, %c0_i32 : i32, i32
  }
  func.func @transform_2(%arg0: i32) -> (i32, i32) {
    %c0_i32 = arith.constant 0 : i32
    %c0_i32_0 = arith.constant 0 : i32
    %c0_i32_1 = arith.constant 0 : i32
    return %c0_i32, %c0_i32_0 : i32, i32
  }
  func.func @transform_3(%arg0: i32) -> (i32, i32) {
    %c0_i32 = arith.constant 0 : i32
    %c0_i32_0 = arith.constant 0 : i32
    %c0_i32_1 = arith.constant 0 : i32
    return %c0_i32, %c0_i32_0 : i32, i32
  }
  func.func @transform_4(%arg0: i32) -> (i32, i32) {
    %c0_i32 = arith.constant 0 : i32
    %c0_i32_0 = arith.constant 0 : i32
    %c0_i32_1 = arith.constant 0 : i32
    return %c0_i32, %c0_i32_0 : i32, i32
  }
  func.func @transform_5(%arg0: i32) -> (i32, i32) {
    %c0_i32 = arith.constant 0 : i32
    %c0_i32_0 = arith.constant 0 : i32
    %c0_i32_1 = arith.constant 0 : i32
    return %c0_i32, %c0_i32_0 : i32, i32
  }
  func.func @transform_6(%arg0: i32) -> (i32, i32) {
    %c0_i32 = arith.constant 0 : i32
    %c0_i32_0 = arith.constant 0 : i32
    return %arg0, %c0_i32 : i32, i32
  }
}

</mosaic_0001>

<llo_original>
// kernel: tpu_custom_call.1
$region0: #{tpu_custom_call.1}
  #allocation0 [shape = 'u32[]', space=smem, size = 0x4, offset = 0x4, fixed_abs, tag = 'smem constant byte address 0x4 - core index']
  #allocation1 [shape = 'u32[144,128]{1,0:T(1,128)}', space=vmem, size = 0x12000, scoped, tag = 'internal scratch']
  %s0 = inlined_call_operand.hbm [shape: f32[16,16], index: 0, kind: input, shape index: {}]
  %s1 = inlined_call_operand.hbm [shape: f32[16,32], index: 1, kind: input, shape index: {}]
  %s2 = inlined_call_operand.hbm [shape: f32[16,96], index: 2, kind: input, shape index: {}]
  %s3 = inlined_call_operand.vmem [shape: f32[1,96], index: 3, kind: input, shape index: {}]
  %s4 = inlined_call_operand.hbm [shape: f32[32,96], index: 4, kind: input, shape index: {}]
  %s5 = inlined_call_operand.vmem [shape: f32[1,96], index: 5, kind: input, shape index: {}]
  %s6 = inlined_call_operand.hbm [shape: f32[16,32], index: 6, kind: output, shape index: {}]
  %s7 = sld [smem:[#allocation0]]
  $region50: #{tpu_custom_call.1} parent=0
    _
  %s9 = ssub.s32 1, %s7
  %s10 = scalar_select 0, %s9, %s7
  $region1: #{tpu_custom_call.1} parent=0
    #allocation2 [shape = 'u8[8192]{0}', space=vmem, size = 0x2000, scoped, tag = 'input window, operand 0, single buffered']
    #allocation3 [shape = 's32[1]{0}', space=sflag, size = 0x4, scoped, tag = 'scoped memory for tpu_custom_call.1']
    #allocation4 [shape = 's32[1]{0}', space=sflag, size = 0x4, scoped, tag = 'scoped memory for tpu_custom_call.1']
    #allocation5 [shape = 'u8[8192]{0}', space=vmem, size = 0x2000, scoped, tag = 'input window, operand 1, single buffered']
    #allocation6 [shape = 's32[1]{0}', space=sflag, size = 0x4, scoped, tag = 'scoped memory for tpu_custom_call.1']
    #allocation7 [shape = 'u8[8192]{0}', space=vmem, size = 0x2000, scoped, tag = 'input window, operand 2, single buffered']
    #allocation8 [shape = 'u8[16384]{0}', space=vmem, size = 0x4000, scoped, tag = 'input window, operand 4, single buffered']
    #allocation9 [shape = 's32[1]{0}', space=sflag, size = 0x4, scoped, tag = 'scoped memory for tpu_custom_call.1']
    #allocation10 [shape = 'u8[8192]{0}', space=vmem, size = 0x2000, scoped, tag = 'output window, operand 0, single buffered']
    %11 = vsyncpa [#allocation3], 0
    %12 = vsyncpa [#allocation6], 0
    %13 = vsyncpa [#allocation9], 0
    %14 = vsyncpa [#allocation4], 0
    // Predicated region
    $region2: #{tpu_custom_call.1} parent=1 // pred_check
      _
    $region3: #{tpu_custom_call.1} parent=1 // pred_check_branch
      %16 = sbr.rel (0) target = $region5
    $region4: #{tpu_custom_call.1} parent=1 // pred_region
      %s18 = ssub.s32 256, 256
      %19 = vsyncadd [#allocation3], %s18
      %s20 = sshll.u32 [#allocation2], 4
      %s21 = int_to_ptr.vmem [resolvable:$true] %s20
      %26 = dma.hbm_to_vmem [thread:$0]  %s0, 256, %s21, [#allocation3], 128, 128, 8
    $region5: #{tpu_custom_call.1} parent=1 // pred_fallthru
      _
    // Predicated region
    $region6: #{tpu_custom_call.1} parent=1 // pred_check
      _
    $region7: #{tpu_custom_call.1} parent=1 // pred_check_branch
      %28 = sbr.rel (0) target = $region9
    $region8: #{tpu_custom_call.1} parent=1 // pred_region
      %s30 = ssub.s32 256, 256
      %31 = vsyncadd [#allocation6], %s30
      %s32 = sshll.u32 [#allocation5], 4
      %s33 = int_to_ptr.vmem [resolvable:$true] %s32
      %38 = dma.hbm_to_vmem [thread:$0]  %s1, 256, %s33, [#allocation6], 128, 128, 8
    $region9: #{tpu_custom_call.1} parent=1 // pred_fallthru
      _
    // Predicated region
    $region10: #{tpu_custom_call.1} parent=1 // pred_check
      _
    $region11: #{tpu_custom_call.1} parent=1 // pred_check_branch
      %40 = sbr.rel (0) target = $region13
    $region12: #{tpu_custom_call.1} parent=1 // pred_region
      %s42 = ssub.s32 256, 256
      %43 = vsyncadd [#allocation6], %s42
      %s44 = sshll.u32 [#allocation7], 4
      %s45 = int_to_ptr.vmem [resolvable:$true] %s44
      %50 = dma.hbm_to_vmem [thread:$0]  %s2, 256, %s45, [#allocation6], 128, 128, 8
    $region13: #{tpu_custom_call.1} parent=1 // pred_fallthru
      _
    // Predicated region
    $region14: #{tpu_custom_call.1} parent=1 // pred_check
      _
    $region15: #{tpu_custom_call.1} parent=1 // pred_check_branch
      %52 = sbr.rel (0) target = $region17
    $region16: #{tpu_custom_call.1} parent=1 // pred_region
      _
    $region17: #{tpu_custom_call.1} parent=1 // pred_fallthru
      _
    // Predicated region
    $region18: #{tpu_custom_call.1} parent=1 // pred_check
      _
    $region19: #{tpu_custom_call.1} parent=1 // pred_check_branch
      %54 = sbr.rel (0) target = $region21
    $region20: #{tpu_custom_call.1} parent=1 // pred_region
      %s56 = ssub.s32 512, 512
      %57 = vsyncadd [#allocation9], %s56
      %s58 = sshll.u32 [#allocation8], 4
      %s59 = int_to_ptr.vmem [resolvable:$true] %s58
      %64 = dma.hbm_to_vmem [thread:$0]  %s4, 512, %s59, [#allocation9], 128, 128, 8
    $region21: #{tpu_custom_call.1} parent=1 // pred_fallthru
      _
    // Predicated region
    $region22: #{tpu_custom_call.1} parent=1 // pred_check
      _
    $region23: #{tpu_custom_call.1} parent=1 // pred_check_branch
      %66 = sbr.rel (0) target = $region25
    $region24: #{tpu_custom_call.1} parent=1 // pred_region
      _
    $region25: #{tpu_custom_call.1} parent=1 // pred_fallthru
      _
    // Predicated region
    $region26: #{tpu_custom_call.1} parent=1 // pred_check
      _
    $region27: #{tpu_custom_call.1} parent=1 // pred_check_branch
      %68 = sbr.rel (0) target = $region29
    $region28: #{tpu_custom_call.1} parent=1 // pred_region
      %69 = dma.done [#allocation3], 256
    $region29: #{tpu_custom_call.1} parent=1 // pred_fallthru
      _
    // Predicated region
    $region30: #{tpu_custom_call.1} parent=1 // pred_check
      _
    $region31: #{tpu_custom_call.1} parent=1 // pred_check_branch
      %71 = sbr.rel (0) target = $region33
    $region32: #{tpu_custom_call.1} parent=1 // pred_region
      %72 = dma.done [#allocation6], 256
    $region33: #{tpu_custom_call.1} parent=1 // pred_fallthru
      _
    // Predicated region
    $region34: #{tpu_custom_call.1} parent=1 // pred_check
      _
    $region35: #{tpu_custom_call.1} parent=1 // pred_check_branch
      %74 = sbr.rel (0) target = $region37
    $region36: #{tpu_custom_call.1} parent=1 // pred_region
      %75 = dma.done [#allocation6], 256
    $region37: #{tpu_custom_call.1} parent=1 // pred_fallthru
      _
    // Predicated region
    $region38: #{tpu_custom_call.1} parent=1 // pred_check
      _
    $region39: #{tpu_custom_call.1} parent=1 // pred_check_branch
      %77 = sbr.rel (0) target = $region41
    $region40: #{tpu_custom_call.1} parent=1 // pred_region
      %78 = dma.done [#allocation9], 512
    $region41: #{tpu_custom_call.1} parent=1 // pred_fallthru
      _
    %v79 = vld [vmem:[#allocation2] sm:$0xff]
    %v80 = vld [vmem:[#allocation2 + $0x8] sm:$0xff]
    %v81 = vld [vmem:[#allocation5] sm:$0xff]
    %v82 = vld [vmem:[#allocation5 + $0x8] sm:$0xff]
    %v83 = vld [vmem:[#allocation7] sm:$0xff]
    %v84 = vld [vmem:[#allocation7 + $0x8] sm:$0xff]
    %v85 = vld [vmem:[%s3] sm:$0x1]
    %v87 = vlaneseq
    %v88 = vshrl.u32 %v87, 7
    %v89 = vsub.s32 0, %v88
    %v90 = vrot.slane %v85, %v89
    %vm92 = vcmask 130048
    %v94 = vsel %vm92, %v79, 0
    %v97 = vsel %vm92, %v80, 0
    %99 = vmatprep.subr.mxu0 0.0
    %100 = vmatpush1.msra.mxu0 %v83
    %101 = vmatprep.subr.mxu0 0.0
    %102 = vmatpush1.msra.mxu0 %v84
    %103 = vmatprep.subr.mxu0 0.0
    %104 = vmatpush1.msra.mxu0 0.0
    %105 = vmatprep.subr.mxu0 0.0
    %106 = vmatpush1.msra.mxu0 0.0
    %107 = vmatprep.subr.mxu0 0.0
    %108 = vmatpush1.msra.mxu0 0.0
    %109 = vmatprep.subr.mxu0 0.0
    %110 = vmatpush1.msra.mxu0 0.0
    %111 = vmatprep.subr.mxu0 0.0
    %112 = vmatpush1.msra.mxu0 0.0
    %113 = vmatprep.subr.mxu0 0.0
    %114 = vmatpush1.msra.mxu0 0.0
    %115 = vmatprep.subr.mxu0 0.0
    %116 = vmatpush1.msra.mxu0 0.0
    %117 = vmatprep.subr.mxu0 0.0
    %118 = vmatpush1.msra.mxu0 0.0
    %119 = vmatprep.subr.mxu0 0.0
    %120 = vmatpush1.msra.mxu0 0.0
    %121 = vmatprep.subr.mxu0 0.0
    %122 = vmatpush1.msra.mxu0 0.0
    %123 = vmatprep.subr.mxu0 0.0
    %124 = vmatpush1.msra.mxu0 0.0
    %125 = vmatprep.subr.mxu0 0.0
    %126 = vmatpush1.msra.mxu0 0.0
    %127 = vmatprep.subr.mxu0 0.0
    %128 = vmatpush1.msra.mxu0 0.0
    %129 = vmatprep.subr.mxu0 0.0
    %130 = vmatpush1.msra.mxu0 0.0
    %131 = vmatprep.subr.mxu0 0.0
    %132 = vmatpush1.msra.mxu0 0.0
    %133 = vmatprep.subr.mxu0 0.0
    %134 = vmatpush1.msra.mxu0 0.0
    %135 = vmatprep.subr.mxu0 0.0
    %136 = vmatpush1.msra.mxu0 0.0
    %137 = vmatprep.subr.mxu0 0.0
    %138 = vmatpush1.msra.mxu0 0.0
    %139 = vmatprep.subr.mxu0 0.0
    %140 = vmatpush1.msra.mxu0 0.0
    %141 = vmatprep.subr.mxu0 0.0
    %142 = vmatpush1.msra.mxu0 0.0
    %143 = vmatprep.subr.mxu0 0.0
    %144 = vmatpush1.msra.mxu0 0.0
    %145 = vmatprep.subr.mxu0 0.0
    %146 = vmatpush1.msra.mxu0 0.0
    %147 = vmatprep.subr.mxu0 0.0
    %148 = vmatpush1.msra.mxu0 0.0
    %149 = vmatprep.subr.mxu0 0.0
    %150 = vmatpush1.msra.mxu0 0.0
    %151 = vmatprep.subr.mxu0 0.0
    %152 = vmatpush1.msra.mxu0 0.0
    %153 = vmatprep.subr.mxu0 0.0
    %154 = vmatpush1.msra.mxu0 0.0
    %155 = vmatprep.subr.mxu0 0.0
    %156 = vmatpush1.msra.mxu0 0.0
    %157 = vmatprep.subr.mxu0 0.0
    %158 = vmatpush1.msra.mxu0 0.0
    %159 = vmatprep.subr.mxu0 0.0
    %160 = vmatpush1.msra.mxu0 0.0
    %161 = vmatprep.subr.mxu0 0.0
    %162 = vmatpush1.msra.mxu0 0.0
    %163 = vmatprep.mubr.f32.mxu0 0.0
    %164 = vmatmul.mubr.f32.gmra.mrb[0].mxu0 %v94
    %v165 = vpop.f32.mrb[0].mxu0
    %v166 = vadd.f32 %v90, %v165
    %v167 = vpop.f32.mrb[0].mxu0
    %168 = vmatprep.mubr.f32.mxu0 0.0
    %169 = vmatmul.mubr.f32.gmra.mrb[0].mxu0 %v97
    %v170 = vpop.f32.mrb[0].mxu0
    %v171 = vadd.f32 %v90, %v170
    %v172 = vpop.f32.mrb[0].mxu0
    %173 = vdwg.mxu0
    %v174 = vld [vmem:[#allocation8] sm:$0xff]
    %v175 = vld [vmem:[#allocation8 + $0x8] sm:$0xff]
    %v176 = vld [vmem:[#allocation8 + $0x10] sm:$0xff]
    %v177 = vld [vmem:[#allocation8 + $0x18] sm:$0xff]
    %v178 = vld [vmem:[%s5] sm:$0x1]
    %v180 = vlaneseq
    %v181 = vshrl.u32 %v180, 7
    %v182 = vsub.s32 0, %v181
    %v183 = vrot.slane %v178, %v182
    %vm185 = vcmask 261120
    %v187 = vsel %vm185, %v81, 0
    %v190 = vsel %vm185, %v82, 0
    %192 = vmatprep.subr.mxu0 0.0
    %193 = vmatpush1.msra.mxu0 %v174
    %194 = vmatprep.subr.mxu0 0.0
    %195 = vmatpush1.msra.mxu0 %v175
    %196 = vmatprep.subr.mxu0 0.0
    %197 = vmatpush1.msra.mxu0 %v176
    %198 = vmatprep.subr.mxu0 0.0
    %199 = vmatpush1.msra.mxu0 %v177
    %200 = vmatprep.subr.mxu0 0.0
    %201 = vmatpush1.msra.mxu0 0.0
    %202 = vmatprep.subr.mxu0 0.0
    %203 = vmatpush1.msra.mxu0 0.0
    %204 = vmatprep.subr.mxu0 0.0
    %205 = vmatpush1.msra.mxu0 0.0
    %206 = vmatprep.subr.mxu0 0.0
    %207 = vmatpush1.msra.mxu0 0.0
    %208 = vmatprep.subr.mxu0 0.0
    %209 = vmatpush1.msra.mxu0 0.0
    %210 = vmatprep.subr.mxu0 0.0
    %211 = vmatpush1.msra.mxu0 0.0
    %212 = vmatprep.subr.mxu0 0.0
    %213 = vmatpush1.msra.mxu0 0.0
    %214 = vmatprep.subr.mxu0 0.0
    %215 = vmatpush1.msra.mxu0 0.0
    %216 = vmatprep.subr.mxu0 0.0
    %217 = vmatpush1.msra.mxu0 0.0
    %218 = vmatprep.subr.mxu0 0.0
    %219 = vmatpush1.msra.mxu0 0.0
    %220 = vmatprep.subr.mxu0 0.0
    %221 = vmatpush1.msra.mxu0 0.0
    %222 = vmatprep.subr.mxu0 0.0
    %223 = vmatpush1.msra.mxu0 0.0
    %224 = vmatprep.subr.mxu0 0.0
    %225 = vmatpush1.msra.mxu0 0.0
    %226 = vmatprep.subr.mxu0 0.0
    %227 = vmatpush1.msra.mxu0 0.0
    %228 = vmatprep.subr.mxu0 0.0
    %229 = vmatpush1.msra.mxu0 0.0
    %230 = vmatprep.subr.mxu0 0.0
    %231 = vmatpush1.msra.mxu0 0.0
    %232 = vmatprep.subr.mxu0 0.0
    %233 = vmatpush1.msra.mxu0 0.0
    %234 = vmatprep.subr.mxu0 0.0
    %235 = vmatpush1.msra.mxu0 0.0
    %236 = vmatprep.subr.mxu0 0.0
    %237 = vmatpush1.msra.mxu0 0.0
    %238 = vmatprep.subr.mxu0 0.0
    %239 = vmatpush1.msra.mxu0 0.0
    %240 = vmatprep.subr.mxu0 0.0
    %241 = vmatpush1.msra.mxu0 0.0
    %242 = vmatprep.subr.mxu0 0.0
    %243 = vmatpush1.msra.mxu0 0.0
    %244 = vmatprep.subr.mxu0 0.0
    %245 = vmatpush1.msra.mxu0 0.0
    %246 = vmatprep.subr.mxu0 0.0
    %247 = vmatpush1.msra.mxu0 0.0
    %248 = vmatprep.subr.mxu0 0.0
    %249 = vmatpush1.msra.mxu0 0.0
    %250 = vmatprep.subr.mxu0 0.0
    %251 = vmatpush1.msra.mxu0 0.0
    %252 = vmatprep.subr.mxu0 0.0
    %253 = vmatpush1.msra.mxu0 0.0
    %254 = vmatprep.subr.mxu0 0.0
    %255 = vmatpush1.msra.mxu0 0.0
    %256 = vmatprep.mubr.f32.mxu0 0.0
    %257 = vmatmul.mubr.f32.gmra.mrb[0].mxu0 %v187
    %v258 = vpop.f32.mrb[0].mxu0
    %v259 = vadd.f32 %v183, %v258
    %v260 = vpop.f32.mrb[0].mxu0
    %261 = vmatprep.mubr.f32.mxu0 0.0
    %262 = vmatmul.mubr.f32.gmra.mrb[0].mxu0 %v190
    %v263 = vpop.f32.mrb[0].mxu0
    %v264 = vadd.f32 %v183, %v263
    %v265 = vpop.f32.mrb[0].mxu0
    %266 = vdwg.mxu0
    %v267 = vadd.f32 %v166, %v259
    %v268 = vadd.f32 %v171, %v264
    %v269 = vxor.u32 %v267, 2147483648
    %v270 = vxor.u32 %v268, 2147483648
    %v271 = vmul.f32 %v269, 1.442695
    %v272 = vpow.pop %v271
    %v273 = vmul.f32 %v270, 1.442695
    %v274 = vpow.pop %v273
    %v275 = vadd.f32 %v272, 1.0
    %v276 = vadd.f32 %v274, 1.0
    %v277 = vrcp.pop %v275
    %v278 = vmul.f32 1.0, %v277
    %v279 = vrcp.pop %v276
    %v280 = vmul.f32 1.0, %v279
    %283 = vrot.lane.b32.xlu0 %v259, 64
    %v284 = vpop.permute.xlu0 %283
    %285 = vrot.lane.b32.xlu0 %v264, 64
    %v286 = vpop.permute.xlu0 %285
    %v289 = vmul.f32 %v278, %v284
    %v290 = vmul.f32 %v280, %v286
    %293 = vrot.lane.b32.xlu0 %v289, 64
    %v294 = vpop.permute.xlu0 %293
    %295 = vrot.lane.b32.xlu0 %v290, 64
    %v296 = vpop.permute.xlu0 %295
    %v299 = vadd.f32 %v166, %v294
    %v300 = vadd.f32 %v171, %v296
    %v301 = vtanh.pop %v299
    %v302 = vtanh.pop %v300
    %305 = vrot.lane.b32.xlu0 %v301, 64
    %v306 = vpop.permute.xlu0 %305
    %307 = vrot.lane.b32.xlu0 %v302, 64
    %v308 = vpop.permute.xlu0 %307
    %v311 = vsub.f32 %v81, %v306
    %v312 = vsub.f32 %v82, %v308
    %315 = vrot.lane.b32.xlu0 %v311, 32
    %v316 = vpop.permute.xlu0 %315
    %317 = vrot.lane.b32.xlu0 %v312, 32
    %v318 = vpop.permute.xlu0 %317
    %v321 = vmul.f32 %v278, %v316
    %v322 = vmul.f32 %v280, %v318
    %325 = vrot.lane.b32.xlu0 %v321, 32
    %v326 = vpop.permute.xlu0 %325
    %327 = vrot.lane.b32.xlu0 %v322, 32
    %v328 = vpop.permute.xlu0 %327
    %v331 = vadd.f32 %v301, %v326
    %v332 = vadd.f32 %v302, %v328
    %335 = vrot.lane.b32.xlu0 %v331, 64
    %v336 = vpop.permute.xlu0 %335
    %337 = vrot.lane.b32.xlu0 %v332, 64
    %v338 = vpop.permute.xlu0 %337
    %341 = vst.msk [vmem:[#allocation10] sm:$0xff] %vm185, %v336
    %342 = vst.msk [vmem:[#allocation10 + $0x8] sm:$0xff] %vm185, %v338
    // Predicated region
    $region42: #{tpu_custom_call.1} parent=1 // pred_check
      _
    $region43: #{tpu_custom_call.1} parent=1 // pred_check_branch
      %344 = sbr.rel (0) target = $region45
    $region44: #{tpu_custom_call.1} parent=1 // pred_region
      %s346 = ssub.s32 256, 256
      %347 = vsyncadd [#allocation4], %s346
      %s348 = sshll.u32 [#allocation10], 4
      %s349 = int_to_ptr.vmem [resolvable:$true] %s348
      %354 = dma.vmem_to_hbm [thread:$0]  %s349, 256, %s6, [#allocation4], 128, 128, 8
    $region45: #{tpu_custom_call.1} parent=1 // pred_fallthru
      _
    // Predicated region
    $region46: #{tpu_custom_call.1} parent=1 // pred_check
      _
    $region47: #{tpu_custom_call.1} parent=1 // pred_check_branch
      %356 = sbr.rel (0) target = $region49
    $region48: #{tpu_custom_call.1} parent=1 // pred_region
      %357 = dma.done [#allocation4], 256
    $region49: #{tpu_custom_call.1} parent=1 // pred_fallthru
      _
    %358 = vsyncpa [#allocation3], 1
    %359 = vsyncpa [#allocation6], 1
    %360 = vsyncpa [#allocation9], 1
    %361 = vsyncpa [#allocation4], 1

// kernel: tpu_custom_call.1
$region0: #{tpu_custom_call.1}
  #allocation0 [shape = 'u32[]', space=smem, size = 0x4, offset = 0x4, fixed_abs, tag = 'smem constant byte address 0x4 - core index']
  #allocation1 [shape = 'u32[144,128]{1,0:T(1,128)}', space=vmem, size = 0x12000, scoped, tag = 'internal scratch']
  %s0 = inlined_call_operand.hbm [shape: f32[16,16], index: 0, kind: input, shape index: {}]
  %s1 = inlined_call_operand.hbm [shape: f32[16,32], index: 1, kind: input, shape index: {}]
  %s2 = inlined_call_operand.hbm [shape: f32[16,96], index: 2, kind: input, shape index: {}]
  %s3 = inlined_call_operand.vmem [shape: f32[1,96], index: 3, kind: input, shape index: {}]
  %s4 = inlined_call_operand.hbm [shape: f32[32,96], index: 4, kind: input, shape index: {}]
  %s5 = inlined_call_operand.vmem [shape: f32[1,96], index: 5, kind: input, shape index: {}]
  %s6 = inlined_call_operand.hbm [shape: f32[16,32], index: 6, kind: output, shape index: {}]
  %s7 = sld [smem:[#allocation0]]
  $region50: #{tpu_custom_call.1} parent=0
    _
  %s9 = ssub.s32 1, %s7
  %s10 = scalar_select 0, %s9, %s7
  $region1: #{tpu_custom_call.1} parent=0
    #allocation2 [shape = 'u8[8192]{0}', space=vmem, size = 0x2000, scoped, tag = 'input window, operand 0, single buffered']
    #allocation3 [shape = 's32[1]{0}', space=sflag, size = 0x4, scoped, tag = 'scoped memory for tpu_custom_call.1']
    #allocation4 [shape = 's32[1]{0}', space=sflag, size = 0x4, scoped, tag = 'scoped memory for tpu_custom_call.1']
    #allocation5 [shape = 'u8[8192]{0}', space=vmem, size = 0x2000, scoped, tag = 'input window, operand 1, single buffered']
    #allocation6 [shape = 's32[1]{0}', space=sflag, size = 0x4, scoped, tag = 'scoped memory for tpu_custom_call.1']
    #allocation7 [shape = 'u8[8192]{0}', space=vmem, size = 0x2000, scoped, tag = 'input window, operand 2, single buffered']
    #allocation8 [shape = 'u8[16384]{0}', space=vmem, size = 0x4000, scoped, tag = 'input window, operand 4, single buffered']
    #allocation9 [shape = 's32[1]{0}', space=sflag, size = 0x4, scoped, tag = 'scoped memory for tpu_custom_call.1']
    #allocation10 [shape = 'u8[8192]{0}', space=vmem, size = 0x2000, scoped, tag = 'output window, operand 0, single buffered']
    %11 = vsyncpa [#allocation3], 0
    %12 = vsyncpa [#allocation6], 0
    %13 = vsyncpa [#allocation9], 0
    %14 = vsyncpa [#allocation4], 0
    // Predicated region
    $region2: #{tpu_custom_call.1} parent=1 // pred_check
      _
    $region3: #{tpu_custom_call.1} parent=1 // pred_check_branch
      %16 = sbr.rel (0) target = $region5
    $region4: #{tpu_custom_call.1} parent=1 // pred_region
      %s18 = ssub.s32 256, 256
      %19 = vsyncadd [#allocation3], %s18
      %s20 = sshll.u32 [#allocation2], 4
      %s21 = int_to_ptr.vmem [resolvable:$true] %s20
      %26 = dma.hbm_to_vmem [thread:$0]  %s0, 256, %s21, [#allocation3], 128, 128, 8
    $region5: #{tpu_custom_call.1} parent=1 // pred_fallthru
      _
    // Predicated region
    $region6: #{tpu_custom_call.1} parent=1 // pred_check
      _
    $region7: #{tpu_custom_call.1} parent=1 // pred_check_branch
      %28 = sbr.rel (0) target = $region9
    $region8: #{tpu_custom_call.1} parent=1 // pred_region
      %s30 = ssub.s32 256, 256
      %31 = vsyncadd [#allocation6], %s30
      %s32 = sshll.u32 [#allocation5], 4
      %s33 = int_to_ptr.vmem [resolvable:$true] %s32
      %38 = dma.hbm_to_vmem [thread:$0]  %s1, 256, %s33, [#allocation6], 128, 128, 8
    $region9: #{tpu_custom_call.1} parent=1 // pred_fallthru
      _
    // Predicated region
    $region10: #{tpu_custom_call.1} parent=1 // pred_check
      _
    $region11: #{tpu_custom_call.1} parent=1 // pred_check_branch
      %40 = sbr.rel (0) target = $region13
    $region12: #{tpu_custom_call.1} parent=1 // pred_region
      %s42 = ssub.s32 256, 256
      %43 = vsyncadd [#allocation6], %s42
      %s44 = sshll.u32 [#allocation7], 4
      %s45 = int_to_ptr.vmem [resolvable:$true] %s44
      %50 = dma.hbm_to_vmem [thread:$0]  %s2, 256, %s45, [#allocation6], 128, 128, 8
    $region13: #{tpu_custom_call.1} parent=1 // pred_fallthru
      _
    // Predicated region
    $region14: #{tpu_custom_call.1} parent=1 // pred_check
      _
    $region15: #{tpu_custom_call.1} parent=1 // pred_check_branch
      %52 = sbr.rel (0) target = $region17
    $region16: #{tpu_custom_call.1} parent=1 // pred_region
      _
    $region17: #{tpu_custom_call.1} parent=1 // pred_fallthru
      _
    // Predicated region
    $region18: #{tpu_custom_call.1} parent=1 // pred_check
      _
    $region19: #{tpu_custom_call.1} parent=1 // pred_check_branch
      %54 = sbr.rel (0) target = $region21
    $region20: #{tpu_custom_call.1} parent=1 // pred_region
      %s56 = ssub.s32 512, 512
      %57 = vsyncadd [#allocation9], %s56
      %s58 = sshll.u32 [#allocation8], 4
      %s59 = int_to_ptr.vmem [resolvable:$true] %s58
      %64 = dma.hbm_to_vmem [thread:$0]  %s4, 512, %s59, [#allocation9], 128, 128, 8
    $region21: #{tpu_custom_call.1} parent=1 // pred_fallthru
      _
    // Predicated region
    $region22: #{tpu_custom_call.1} parent=1 // pred_check
      _
    $region23: #{tpu_custom_call.1} parent=1 // pred_check_branch
      %66 = sbr.rel (0) target = $region25
    $region24: #{tpu_custom_call.1} parent=1 // pred_region
      _
    $region25: #{tpu_custom_call.1} parent=1 // pred_fallthru
      _
    // Predicated region
    $region26: #{tpu_custom_call.1} parent=1 // pred_check
      _
    $region27: #{tpu_custom_call.1} parent=1 // pred_check_branch
      %68 = sbr.rel (0) target = $region29
    $region28: #{tpu_custom_call.1} parent=1 // pred_region
      %69 = dma.done [#allocation3], 256
    $region29: #{tpu_custom_call.1} parent=1 // pred_fallthru
      _
    // Predicated region
    $region30: #{tpu_custom_call.1} parent=1 // pred_check
      _
    $region31: #{tpu_custom_call.1} parent=1 // pred_check_branch
      %71 = sbr.rel (0) target = $region33
    $region32: #{tpu_custom_call.1} parent=1 // pred_region
      %72 = dma.done [#allocation6], 256
    $region33: #{tpu_custom_call.1} parent=1 // pred_fallthru
      _
    // Predicated region
    $region34: #{tpu_custom_call.1} parent=1 // pred_check
      _
    $region35: #{tpu_custom_call.1} parent=1 // pred_check_branch
      %74 = sbr.rel (0) target = $region37
    $region36: #{tpu_custom_call.1} parent=1 // pred_region
      %75 = dma.done [#allocation6], 256
    $region37: #{tpu_custom_call.1} parent=1 // pred_fallthru
      _
    // Predicated region
    $region38: #{tpu_custom_call.1} parent=1 // pred_check
      _
    $region39: #{tpu_custom_call.1} parent=1 // pred_check_branch
      %77 = sbr.rel (0) target = $region41
    $region40: #{tpu_custom_call.1} parent=1 // pred_region
      %78 = dma.done [#allocation9], 512
    $region41: #{tpu_custom_call.1} parent=1 // pred_fallthru
      _
    %v79 = vld [vmem:[#allocation2] sm:$0xff]
    %v80 = vld [vmem:[#allocation2 + $0x8] sm:$0xff]
    %v81 = vld [vmem:[#allocation5] sm:$0xff]
    %v82 = vld [vmem:[#allocation5 + $0x8] sm:$0xff]
    %v83 = vld [vmem:[#allocation7] sm:$0xff]
    %v84 = vld [vmem:[#allocation7 + $0x8] sm:$0xff]
    %v85 = vld [vmem:[%s3] sm:$0x1]
    %v87 = vlaneseq
    %v88 = vshrl.u32 %v87, 7
    %v89 = vsub.s32 0, %v88
    %v90 = vrot.slane %v85, %v89
    %vm92 = vcmask 130048
    %v94 = vsel %vm92, %v79, 0
    %v97 = vsel %vm92, %v80, 0
    %99 = vmatprep.subr.mxu0 0.0
    %100 = vmatpush1.msra.mxu0 %v83
    %101 = vmatprep.subr.mxu0 0.0
    %102 = vmatpush1.msra.mxu0 %v84
    %103 = vmatprep.subr.mxu0 0.0
    %104 = vmatpush1.msra.mxu0 0.0
    %105 = vmatprep.subr.mxu0 0.0
    %106 = vmatpush1.msra.mxu0 0.0
    %107 = vmatprep.subr.mxu0 0.0
    %108 = vmatpush1.msra.mxu0 0.0
    %109 = vmatprep.subr.mxu0 0.0
    %110 = vmatpush1.msra.mxu0 0.0
    %111 = vmatprep.subr.mxu0 0.0
    %112 = vmatpush1.msra.mxu0 0.0
    %113 = vmatprep.subr.mxu0 0.0
    %114 = vmatpush1.msra.mxu0 0.0
    %115 = vmatprep.subr.mxu0 0.0
    %116 = vmatpush1.msra.mxu0 0.0
    %117 = vmatprep.subr.mxu0 0.0
    %118 = vmatpush1.msra.mxu0 0.0
    %119 = vmatprep.subr.mxu0 0.0
    %120 = vmatpush1.msra.mxu0 0.0
    %121 = vmatprep.subr.mxu0 0.0
    %122 = vmatpush1.msra.mxu0 0.0
    %123 = vmatprep.subr.mxu0 0.0
    %124 = vmatpush1.msra.mxu0 0.0
    %125 = vmatprep.subr.mxu0 0.0
    %126 = vmatpush1.msra.mxu0 0.0
    %127 = vmatprep.subr.mxu0 0.0
    %128 = vmatpush1.msra.mxu0 0.0
    %129 = vmatprep.subr.mxu0 0.0
    %130 = vmatpush1.msra.mxu0 0.0
    %131 = vmatprep.subr.mxu0 0.0
    %132 = vmatpush1.msra.mxu0 0.0
    %133 = vmatprep.subr.mxu0 0.0
    %134 = vmatpush1.msra.mxu0 0.0
    %135 = vmatprep.subr.mxu0 0.0
    %136 = vmatpush1.msra.mxu0 0.0
    %137 = vmatprep.subr.mxu0 0.0
    %138 = vmatpush1.msra.mxu0 0.0
    %139 = vmatprep.subr.mxu0 0.0
    %140 = vmatpush1.msra.mxu0 0.0
    %141 = vmatprep.subr.mxu0 0.0
    %142 = vmatpush1.msra.mxu0 0.0
    %143 = vmatprep.subr.mxu0 0.0
    %144 = vmatpush1.msra.mxu0 0.0
    %145 = vmatprep.subr.mxu0 0.0
    %146 = vmatpush1.msra.mxu0 0.0
    %147 = vmatprep.subr.mxu0 0.0
    %148 = vmatpush1.msra.mxu0 0.0
    %149 = vmatprep.subr.mxu0 0.0
    %150 = vmatpush1.msra.mxu0 0.0
    %151 = vmatprep.subr.mxu0 0.0
    %152 = vmatpush1.msra.mxu0 0.0
    %153 = vmatprep.subr.mxu0 0.0
    %154 = vmatpush1.msra.mxu0 0.0
    %155 = vmatprep.subr.mxu0 0.0
    %156 = vmatpush1.msra.mxu0 0.0
    %157 = vmatprep.subr.mxu0 0.0
    %158 = vmatpush1.msra.mxu0 0.0
    %159 = vmatprep.subr.mxu0 0.0
    %160 = vmatpush1.msra.mxu0 0.0
    %161 = vmatprep.subr.mxu0 0.0
    %162 = vmatpush1.msra.mxu0 0.0
    %163 = vmatprep.mubr.f32.mxu0 0.0
    %164 = vmatmul.mubr.f32.gmra.mrb[0].mxu0 %v94
    %v165 = vpop.f32.mrb[0].mxu0
    %v166 = vadd.f32 %v90, %v165
    %v167 = vpop.f32.mrb[0].mxu0
    %168 = vmatprep.mubr.f32.mxu0 0.0
    %169 = vmatmul.mubr.f32.gmra.mrb[0].mxu0 %v97
    %v170 = vpop.f32.mrb[0].mxu0
    %v171 = vadd.f32 %v90, %v170
    %v172 = vpop.f32.mrb[0].mxu0
    %173 = vdwg.mxu0
    %v174 = vld [vmem:[#allocation8] sm:$0xff]
    %v175 = vld [vmem:[#allocation8 + $0x8] sm:$0xff]
    %v176 = vld [vmem:[#allocation8 + $0x10] sm:$0xff]
    %v177 = vld [vmem:[#allocation8 + $0x18] sm:$0xff]
    %v178 = vld [vmem:[%s5] sm:$0x1]
    %v180 = vlaneseq
    %v181 = vshrl.u32 %v180, 7
    %v182 = vsub.s32 0, %v181
    %v183 = vrot.slane %v178, %v182
    %vm185 = vcmask 261120
    %v187 = vsel %vm185, %v81, 0
    %v190 = vsel %vm185, %v82, 0
    %192 = vmatprep.subr.mxu0 0.0
    %193 = vmatpush1.msra.mxu0 %v174
    %194 = vmatprep.subr.mxu0 0.0
    %195 = vmatpush1.msra.mxu0 %v175
    %196 = vmatprep.subr.mxu0 0.0
    %197 = vmatpush1.msra.mxu0 %v176
    %198 = vmatprep.subr.mxu0 0.0
    %199 = vmatpush1.msra.mxu0 %v177
    %200 = vmatprep.subr.mxu0 0.0
    %201 = vmatpush1.msra.mxu0 0.0
    %202 = vmatprep.subr.mxu0 0.0
    %203 = vmatpush1.msra.mxu0 0.0
    %204 = vmatprep.subr.mxu0 0.0
    %205 = vmatpush1.msra.mxu0 0.0
    %206 = vmatprep.subr.mxu0 0.0
    %207 = vmatpush1.msra.mxu0 0.0
    %208 = vmatprep.subr.mxu0 0.0
    %209 = vmatpush1.msra.mxu0 0.0
    %210 = vmatprep.subr.mxu0 0.0
    %211 = vmatpush1.msra.mxu0 0.0
    %212 = vmatprep.subr.mxu0 0.0
    %213 = vmatpush1.msra.mxu0 0.0
    %214 = vmatprep.subr.mxu0 0.0
    %215 = vmatpush1.msra.mxu0 0.0
    %216 = vmatprep.subr.mxu0 0.0
    %217 = vmatpush1.msra.mxu0 0.0
    %218 = vmatprep.subr.mxu0 0.0
    %219 = vmatpush1.msra.mxu0 0.0
    %220 = vmatprep.subr.mxu0 0.0
    %221 = vmatpush1.msra.mxu0 0.0
    %222 = vmatprep.subr.mxu0 0.0
    %223 = vmatpush1.msra.mxu0 0.0
    %224 = vmatprep.subr.mxu0 0.0
    %225 = vmatpush1.msra.mxu0 0.0
    %226 = vmatprep.subr.mxu0 0.0
    %227 = vmatpush1.msra.mxu0 0.0
    %228 = vmatprep.subr.mxu0 0.0
    %229 = vmatpush1.msra.mxu0 0.0
    %230 = vmatprep.subr.mxu0 0.0
    %231 = vmatpush1.msra.mxu0 0.0
    %232 = vmatprep.subr.mxu0 0.0
    %233 = vmatpush1.msra.mxu0 0.0
    %234 = vmatprep.subr.mxu0 0.0
    %235 = vmatpush1.msra.mxu0 0.0
    %236 = vmatprep.subr.mxu0 0.0
    %237 = vmatpush1.msra.mxu0 0.0
    %238 = vmatprep.subr.mxu0 0.0
    %239 = vmatpush1.msra.mxu0 0.0
    %240 = vmatprep.subr.mxu0 0.0
    %241 = vmatpush1.msra.mxu0 0.0
    %242 = vmatprep.subr.mxu0 0.0
    %243 = vmatpush1.msra.mxu0 0.0
    %244 = vmatprep.subr.mxu0 0.0
    %245 = vmatpush1.msra.mxu0 0.0
    %246 = vmatprep.subr.mxu0 0.0
    %247 = vmatpush1.msra.mxu0 0.0
    %248 = vmatprep.subr.mxu0 0.0
    %249 = vmatpush1.msra.mxu0 0.0
    %250 = vmatprep.subr.mxu0 0.0
    %251 = vmatpush1.msra.mxu0 0.0
    %252 = vmatprep.subr.mxu0 0.0
    %253 = vmatpush1.msra.mxu0 0.0
    %254 = vmatprep.subr.mxu0 0.0
    %255 = vmatpush1.msra.mxu0 0.0
    %256 = vmatprep.mubr.f32.mxu0 0.0
    %257 = vmatmul.mubr.f32.gmra.mrb[0].mxu0 %v187
    %v258 = vpop.f32.mrb[0].mxu0
    %v259 = vadd.f32 %v183, %v258
    %v260 = vpop.f32.mrb[0].mxu0
    %261 = vmatprep.mubr.f32.mxu0 0.0
    %262 = vmatmul.mubr.f32.gmra.mrb[0].mxu0 %v190
    %v263 = vpop.f32.mrb[0].mxu0
    %v264 = vadd.f32 %v183, %v263
    %v265 = vpop.f32.mrb[0].mxu0
    %266 = vdwg.mxu0
    %v267 = vadd.f32 %v166, %v259
    %v268 = vadd.f32 %v171, %v264
    %v269 = vxor.u32 %v267, 2147483648
    %v270 = vxor.u32 %v268, 2147483648
    %v271 = vmul.f32 %v269, 1.442695
    %v272 = vpow.pop %v271
    %v273 = vmul.f32 %v270, 1.442695
    %v274 = vpow.pop %v273
    %v275 = vadd.f32 %v272, 1.0
    %v276 = vadd.f32 %v274, 1.0
    %v277 = vrcp.pop %v275
    %v278 = vmul.f32 1.0, %v277
    %v279 = vrcp.pop %v276
    %v280 = vmul.f32 1.0, %v279
    %283 = vrot.lane.b32.xlu0 %v259, 64
    %v284 = vpop.permute.xlu0 %283
    %285 = vrot.lane.b32.xlu0 %v264, 64
    %v286 = vpop.permute.xlu0 %285
    %v289 = vmul.f32 %v278, %v284
    %v290 = vmul.f32 %v280, %v286
    %293 = vrot.lane.b32.xlu0 %v289, 64
    %v294 = vpop.permute.xlu0 %293
    %295 = vrot.lane.b32.xlu0 %v290, 64
    %v296 = vpop.permute.xlu0 %295
    %v299 = vadd.f32 %v166, %v294
    %v300 = vadd.f32 %v171, %v296
    %v301 = vtanh.pop %v299
    %v302 = vtanh.pop %v300
    %305 = vrot.lane.b32.xlu0 %v301, 64
    %v306 = vpop.permute.xlu0 %305
    %307 = vrot.lane.b32.xlu0 %v302, 64
    %v308 = vpop.permute.xlu0 %307
    %v311 = vsub.f32 %v81, %v306
    %v312 = vsub.f32 %v82, %v308
    %315 = vrot.lane.b32.xlu0 %v311, 32
    %v316 = vpop.permute.xlu0 %315
    %317 = vrot.lane.b32.xlu0 %v312, 32
    %v318 = vpop.permute.xlu0 %317
    %v321 = vmul.f32 %v278, %v316
    %v322 = vmul.f32 %v280, %v318
    %325 = vrot.lane.b32.xlu0 %v321, 32
    %v326 = vpop.permute.xlu0 %325
    %327 = vrot.lane.b32.xlu0 %v322, 32
    %v328 = vpop.permute.xlu0 %327
    %v331 = vadd.f32 %v301, %v326
    %v332 = vadd.f32 %v302, %v328
    %335 = vrot.lane.b32.xlu0 %v331, 64
    %v336 = vpop.permute.xlu0 %335
    %337 = vrot.lane.b32.xlu0 %v332, 64
    %v338 = vpop.permute.xlu0 %337
    %341 = vst.msk [vmem:[#allocation10] sm:$0xff] %vm185, %v336
    %342 = vst.msk [vmem:[#allocation10 + $0x8] sm:$0xff] %vm185, %v338
    // Predicated region
    $region42: #{tpu_custom_call.1} parent=1 // pred_check
      _
    $region43: #{tpu_custom_call.1} parent=1 // pred_check_branch
      %344 = sbr.rel (0) target = $region45
    $region44: #{tpu_custom_call.1} parent=1 // pred_region
      %s346 = ssub.s32 256, 256
      %347 = vsyncadd [#allocation4], %s346
      %s348 = sshll.u32 [#allocation10], 4
      %s349 = int_to_ptr.vmem [resolvable:$true] %s348
      %354 = dma.vmem_to_hbm [thread:$0]  %s349, 256, %s6, [#allocation4], 128, 128, 8
    $region45: #{tpu_custom_call.1} parent=1 // pred_fallthru
      _
    // Predicated region
    $region46: #{tpu_custom_call.1} parent=1 // pred_check
      _
    $region47: #{tpu_custom_call.1} parent=1 // pred_check_branch
      %356 = sbr.rel (0) target = $region49
    $region48: #{tpu_custom_call.1} parent=1 // pred_region
      %357 = dma.done [#allocation4], 256
    $region49: #{tpu_custom_call.1} parent=1 // pred_fallthru
      _
    %358 = vsyncpa [#allocation3], 1
    %359 = vsyncpa [#allocation6], 1
    %360 = vsyncpa [#allocation9], 1
    %361 = vsyncpa [#allocation4], 1

</llo_original>
